<compile_context>
chip_gen: v7x
topology: tpu7x:2x2x1
jax: 0.10.0
libtpu: 0.0.40
codegen_flags: <defaults>
</compile_context>

<pallas_src>
import functools

import jax
import jax.numpy as jnp
from jax.experimental import pallas as pl
from jax.experimental.pallas import tpu as pltpu


DIM = 10      # matches the reference script's `dim = 10`
HIDDEN = 10   # Linear(2*dim, 10)
OUT = 1       # Linear(10, 1)


def _round_up(a, b):
    return ((a + b - 1) // b) * b


def mine_kernel(inp_ref, w1_ref, w2_ref, out_ref):
    """One batch tile of the MINE MLP, fully folded into two MXU passes.

    inp_ref : [3*dim + 1, TILE]    rows = [x ; y ; y_shuffled ; ones], batch on lanes
    w1_ref  : [2*H + 1, 3*dim + 1] joint rows / marginal rows / ones-carrier row,
                                   first-layer bias folded into the last column
    w2_ref  : [2, 2*H + 1]         block-diagonal second layer, bias in last column
    out_ref : [2, TILE]            lane-dense: row 0 = T_joint, row 1 = T_marginal
    """
    h = jnp.maximum(
        jnp.dot(w1_ref[...], inp_ref[...], preferred_element_type=jnp.float32), 0.0)
    out_ref[...] = jnp.dot(w2_ref[...], h, preferred_element_type=jnp.float32)


def init_mine_params(key, dim=DIM, hidden=HIDDEN, out=OUT):
    """Deterministic parameter init mirroring the PyTorch __init__.

    Weights: xavier_uniform (bound = sqrt(6 / (fan_in + fan_out))), stored in the
    torch [out_features, in_features] layout. Biases: torch Linear default
    U(-1/sqrt(fan_in), 1/sqrt(fan_in)).
    """
    k1, k2, k3, k4 = jax.random.split(key, 4)
    in1, out1 = 2 * dim, hidden
    in2, out2 = hidden, out

    bw1 = (6.0 / (in1 + out1)) ** 0.5
    bw2 = (6.0 / (in2 + out2)) ** 0.5
    w1 = jax.random.uniform(k1, (out1, in1), jnp.float32, -bw1, bw1)   # [HIDDEN, 2*DIM]
    w2 = jax.random.uniform(k2, (out2, in2), jnp.float32, -bw2, bw2)   # [OUT, HIDDEN]

    bb1 = 1.0 / (in1 ** 0.5)
    bb2 = 1.0 / (in2 ** 0.5)
    b1 = jax.random.uniform(k3, (out1,), jnp.float32, -bb1, bb1)
    b2 = jax.random.uniform(k4, (out2,), jnp.float32, -bb2, bb2)
    return w1, b1, w2, b2


@functools.partial(jax.jit, static_argnames=("tile_n",))
def mine_forward(x, y, y_shuffled, params, tile_n=8192):
    """Pallas-backed MINE forward: returns (T_joint, T_marginal), each [N, 1]."""
    w1, b1, w2, b2 = params
    n, dim = x.shape
    hidden = w1.shape[0]
    feat = 3 * dim + 1                       # [x ; y ; y_shuffled ; ones]

    # ---- Tile selection (always a multiple of 128) ----
    n_128 = _round_up(n, 128)
    if n_128 <= tile_n:
        tile = n_128                          # small N: one grid step
    else:
        # large N: keep the grid at >=2 steps (both v7x TensorCores busy),
        # capped at tile_n; VMEM footprint stays ~2 MiB regardless of chip.
        tile = min(tile_n, _round_up(pl.cdiv(n_128, 2), 128))
    n_pad = _round_up(n_128, tile)
    grid = (n_pad // tile,)

    # ---- Pack inputs into ONE feature-major block: [3*dim+1, n_pad] ----
    ones = jnp.ones((n, 1), jnp.float32)
    packed = jnp.concatenate(
        [x.astype(jnp.float32), y.astype(jnp.float32),
         y_shuffled.astype(jnp.float32), ones], axis=1)             # [N, 3*dim+1]
    packed = jnp.pad(packed, ((0, n_pad - n), (0, 0))).T            # [3*dim+1, n_pad]

    # ---- Fold biases + joint/marginal split into two small weight blocks ----
    w1x, w1y = w1[:, :dim], w1[:, dim:]
    zeros_d = jnp.zeros((hidden, dim), jnp.float32)
    b1c = b1.reshape(hidden, 1)
    w1_joint = jnp.concatenate([w1x, w1y, zeros_d, b1c], axis=1)    # [H, 3d+1]
    w1_marg = jnp.concatenate([w1x, zeros_d, w1y, b1c], axis=1)     # [H, 3d+1]
    ones_row = jnp.zeros((1, feat), jnp.float32).at[0, feat - 1].set(1.0)
    w1_aug = jnp.concatenate([w1_joint, w1_marg, ones_row], axis=0)  # [2H+1, 3d+1]

    zeros_h = jnp.zeros((w2.shape[0], hidden), jnp.float32)
    b2c = b2.reshape(w2.shape[0], 1)
    w2_aug = jnp.concatenate(
        [jnp.concatenate([w2, zeros_h, b2c], axis=1),                # -> T_joint
         jnp.concatenate([zeros_h, w2, b2c], axis=1)], axis=0)       # -> T_marginal

    out = pl.pallas_call(
        mine_kernel,
        out_shape=jax.ShapeDtypeStruct((2, n_pad), jnp.float32),
        grid=grid,
        in_specs=[
            pl.BlockSpec((feat, tile), lambda i: (0, i)),            # packed activations
            pl.BlockSpec((2 * hidden + 1, feat), lambda i: (0, 0)),  # W1_aug (resident)
            pl.BlockSpec((2, 2 * hidden + 1), lambda i: (0, 0)),     # W2_aug (resident)
        ],
        out_specs=pl.BlockSpec((2, tile), lambda i: (0, i)),
        compiler_params=pltpu.CompilerParams(
            dimension_semantics=("parallel",),       # shard batch tiles across cores
        ),
    )(packed, w1_aug, w2_aug)

    # Back to the PyTorch [N, 1] convention (strip padding, reshape — no transpose).
    t_joint = out[0, :n].reshape(n, 1)
    t_marginal = out[1, :n].reshape(n, 1)
    return t_joint, t_marginal


def mine_forward_ref(x, y, y_shuffled, params):
    """Pure-JAX reference (torch weight layout) for correctness checking."""
    w1, b1, w2, b2 = params

    def mlp(inp):
        h = jnp.maximum(inp @ w1.T + b1, 0.0)
        return h @ w2.T + b2

    return (mlp(jnp.concatenate([x, y], axis=1)),
            mlp(jnp.concatenate([x, y_shuffled], axis=1)))


if __name__ == "__main__":
    key = jax.random.PRNGKey(0)
    k_param, k_x, k_y, k_perm = jax.random.split(key, 4)

    N = 1000  # matches the reference script's batch_size
    x = jax.random.normal(k_x, (N, DIM), jnp.float32)
    y = jax.random.normal(k_y, (N, DIM), jnp.float32)

    # y[torch.randperm(N)] equivalent (randomness lives outside the kernel).
    perm = jax.random.permutation(k_perm, N)
    y_shuffled = y[perm]

    params = init_mine_params(k_param)

    t_joint, t_marginal = mine_forward(x, y, y_shuffled, params)
    jax.block_until_ready((t_joint, t_marginal))

    # Sanity check against a pure-JAX reference.
    rj, rm = mine_forward_ref(x, y, y_shuffled, params)
    assert t_joint.shape == (N, 1) and t_marginal.shape == (N, 1)
    assert jnp.allclose(t_joint, rj, atol=1e-5, rtol=1e-5)
    assert jnp.allclose(t_marginal, rm, atol=1e-5, rtol=1e-5)

    print("KERNEL_OK")
</pallas_src>

<mosaic_0001>
module attributes {stable_mosaic.version = 11 : i64} {
  func.func @mine_kernel(%arg0: i32, %arg1: memref<31x1024xf32, #tpu.memory_space<vmem>>, %arg2: memref<21x31xf32, #tpu.memory_space<vmem>>, %arg3: memref<2x21xf32, #tpu.memory_space<vmem>>, %arg4: memref<2x1024xf32, #tpu.memory_space<vmem>>) attributes {dimension_semantics = [#tpu.dimension_semantics<parallel>], iteration_bounds = array<i64: 1>, scalar_prefetch = 0 : i64, scratch_operands = 0 : i64, tpu.core_type = #tpu.core_type<tc>, window_params = [{transform_indices = @transform_0, window_bounds = array<i64: 31, 1024>}, {pipeline_mode = #tpu.pipeline_mode<synchronous>, transform_indices = @transform_1, window_bounds = array<i64: 21, 31>}, {pipeline_mode = #tpu.pipeline_mode<synchronous>, transform_indices = @transform_2, window_bounds = array<i64: 2, 21>}, {transform_indices = @transform_3, window_bounds = array<i64: 2, 1024>}]} {
    %c0 = arith.constant 0 : index
    %c0_0 = arith.constant 0 : index
    %0 = vector.load %arg2[%c0, %c0_0] : memref<21x31xf32, #tpu.memory_space<vmem>>, vector<21x31xf32>
    %c0_1 = arith.constant 0 : index
    %c0_2 = arith.constant 0 : index
    %1 = vector.load %arg1[%c0_1, %c0_2] : memref<31x1024xf32, #tpu.memory_space<vmem>>, vector<31x1024xf32>
    %cst = arith.constant dense<0.000000e+00> : vector<21x1024xf32>
    %2 = tpu.matmul %0, %1, %cst {dimension_numbers = #tpu.dot_dimension_numbers<[1], [0], [0], [1], [0, 0, 1, 1], [], []>} : vector<21x31xf32>, vector<31x1024xf32>, vector<21x1024xf32> -> vector<21x1024xf32>
    %cst_3 = arith.constant 0.000000e+00 : f32
    %3 = vector.broadcast %cst_3 : f32 to vector<21x1024xf32>
    %4 = arith.maximumf %2, %3 : vector<21x1024xf32>
    %c0_4 = arith.constant 0 : index
    %c0_5 = arith.constant 0 : index
    %5 = vector.load %arg3[%c0_4, %c0_5] : memref<2x21xf32, #tpu.memory_space<vmem>>, vector<2x21xf32>
    %cst_6 = arith.constant dense<0.000000e+00> : vector<2x1024xf32>
    %6 = tpu.matmul %5, %4, %cst_6 {dimension_numbers = #tpu.dot_dimension_numbers<[1], [0], [0], [1], [0, 0, 1, 1], [], []>} : vector<2x21xf32>, vector<21x1024xf32>, vector<2x1024xf32> -> vector<2x1024xf32>
    %c0_7 = arith.constant 0 : index
    %c0_8 = arith.constant 0 : index
    %7 = vector.load %arg4[%c0_7, %c0_8] : memref<2x1024xf32, #tpu.memory_space<vmem>>, vector<2x1024xf32>
    tpu.vector_store %arg4[%c0_7, %c0_8], %6 {strides = array<i32>} : memref<2x1024xf32, #tpu.memory_space<vmem>>, vector<2x1024xf32>,
    return
  }
  func.func @transform_0(%arg0: i32) -> (i32, i32) {
    %c0_i32 = arith.constant 0 : i32
    %c0_i32_0 = arith.constant 0 : i32
    return %c0_i32, %arg0 : i32, i32
  }
  func.func @transform_1(%arg0: i32) -> (i32, i32) {
    %c0_i32 = arith.constant 0 : i32
    %c0_i32_0 = arith.constant 0 : i32
    %c0_i32_1 = arith.constant 0 : i32
    return %c0_i32, %c0_i32_0 : i32, i32
  }
  func.func @transform_2(%arg0: i32) -> (i32, i32) {
    %c0_i32 = arith.constant 0 : i32
    %c0_i32_0 = arith.constant 0 : i32
    %c0_i32_1 = arith.constant 0 : i32
    return %c0_i32, %c0_i32_0 : i32, i32
  }
  func.func @transform_3(%arg0: i32) -> (i32, i32) {
    %c0_i32 = arith.constant 0 : i32
    %c0_i32_0 = arith.constant 0 : i32
    return %c0_i32, %arg0 : i32, i32
  }
}

</mosaic_0001>

<llo_original>
// kernel: mine_forward.1
$region0: #{mine_forward.1}
  #allocation0 [shape = 'u32[]', space=smem, size = 0x4, offset = 0x4, fixed_abs, tag = 'smem constant byte address 0x4 - core index']
  #allocation1 [shape = 'u32[144,128]{1,0:T(1,128)}', space=vmem, size = 0x12000, scoped, tag = 'internal scratch']
  %s0 = inlined_call_operand.vmem [shape: f32[31,1024], index: 0, kind: input, shape index: {}]
  %s1 = inlined_call_operand.vmem [shape: f32[21,31], index: 1, kind: input, shape index: {}]
  %s2 = inlined_call_operand.vmem [shape: f32[2,21], index: 2, kind: input, shape index: {}]
  %s3 = inlined_call_operand.vmem [shape: f32[2,1024], index: 3, kind: output, shape index: {}]
  %s4 = sld [smem:[#allocation0]]
  $region22: #{mine_forward.1} parent=0
    _
  %s6 = ssub.s32 1, %s4
  %s7 = scalar_select 0, %s6, %s4
  // Predicated region
  $region2: #{mine_forward.1} parent=0 // pred_check
    _
  $region3: #{mine_forward.1} parent=0 // pred_check_branch
    %9 = sbr.rel (0) target = $region5
  $region4: #{mine_forward.1} parent=0 // pred_region
    _
  $region5: #{mine_forward.1} parent=0 // pred_fallthru
    _
  // Predicated region
  $region6: #{mine_forward.1} parent=0 // pred_check
    _
  $region7: #{mine_forward.1} parent=0 // pred_check_branch
    %11 = sbr.rel (0) target = $region9
  $region8: #{mine_forward.1} parent=0 // pred_region
    _
  $region9: #{mine_forward.1} parent=0 // pred_fallthru
    _
  // Predicated region
  $region10: #{mine_forward.1} parent=0 // pred_check
    _
  $region11: #{mine_forward.1} parent=0 // pred_check_branch
    %13 = sbr.rel (0) target = $region13
  $region12: #{mine_forward.1} parent=0 // pred_region
    _
  $region13: #{mine_forward.1} parent=0 // pred_fallthru
    _
  %v14 = vld [vmem:[%s1] sm:$0xff]
  %v15 = vld [vmem:[%s1 + $0x8] sm:$0xff]
  %v16 = vld [vmem:[%s1 + $0x10] sm:$0x1f]
  %v17 = vld [vmem:[%s0] sm:$0xff]
  %v18 = vld [vmem:[%s0 + $0x8] sm:$0xff]
  %v19 = vld [vmem:[%s0 + $0x10] sm:$0xff]
  %v20 = vld [vmem:[%s0 + $0x18] sm:$0xff]
  %v21 = vld [vmem:[%s0 + $0x20] sm:$0xff]
  %v22 = vld [vmem:[%s0 + $0x28] sm:$0xff]
  %v23 = vld [vmem:[%s0 + $0x30] sm:$0xff]
  %v24 = vld [vmem:[%s0 + $0x38] sm:$0xff]
  %v25 = vld [vmem:[%s0 + $0x40] sm:$0xff]
  %v26 = vld [vmem:[%s0 + $0x48] sm:$0xff]
  %v27 = vld [vmem:[%s0 + $0x50] sm:$0xff]
  %v28 = vld [vmem:[%s0 + $0x58] sm:$0xff]
  %v29 = vld [vmem:[%s0 + $0x60] sm:$0xff]
  %v30 = vld [vmem:[%s0 + $0x68] sm:$0xff]
  %v31 = vld [vmem:[%s0 + $0x70] sm:$0xff]
  %v32 = vld [vmem:[%s0 + $0x78] sm:$0xff]
  %v33 = vld [vmem:[%s0 + $0x80] sm:$0xff]
  %v34 = vld [vmem:[%s0 + $0x88] sm:$0xff]
  %v35 = vld [vmem:[%s0 + $0x90] sm:$0xff]
  %v36 = vld [vmem:[%s0 + $0x98] sm:$0xff]
  %v37 = vld [vmem:[%s0 + $0xa0] sm:$0xff]
  %v38 = vld [vmem:[%s0 + $0xa8] sm:$0xff]
  %v39 = vld [vmem:[%s0 + $0xb0] sm:$0xff]
  %v40 = vld [vmem:[%s0 + $0xb8] sm:$0xff]
  %v41 = vld [vmem:[%s0 + $0xc0] sm:$0x7f]
  %v42 = vld [vmem:[%s0 + $0xc8] sm:$0x7f]
  %v43 = vld [vmem:[%s0 + $0xd0] sm:$0x7f]
  %v44 = vld [vmem:[%s0 + $0xd8] sm:$0x7f]
  %v45 = vld [vmem:[%s0 + $0xe0] sm:$0x7f]
  %v46 = vld [vmem:[%s0 + $0xe8] sm:$0x7f]
  %v47 = vld [vmem:[%s0 + $0xf0] sm:$0x7f]
  %v48 = vld [vmem:[%s0 + $0xf8] sm:$0x7f]
  %vm49 = vcmask 252928
  %v51 = vsel %vm49, %v14, 0
  %v54 = vsel %vm49, %v15, 0
  %v57 = vsel %vm49, %v16, 0
  %vm59 = vcmask 1046528
  %v61 = vsel %vm59, %v41, 0
  %v64 = vsel %vm59, %v42, 0
  %v67 = vsel %vm59, %v43, 0
  %v70 = vsel %vm59, %v44, 0
  %v73 = vsel %vm59, %v45, 0
  %v76 = vsel %vm59, %v46, 0
  %v79 = vsel %vm59, %v47, 0
  %v82 = vsel %vm59, %v48, 0
  %84 = vmatprep.subr.mxu0 %v18
  %85 = vmatpush1.msra.mxu0 %v17
  %86 = vmatprep.subr.mxu0 %v26
  %87 = vmatpush1.msra.mxu0 %v25
  %88 = vmatprep.subr.mxu0 %v34
  %89 = vmatpush1.msra.mxu0 %v33
  %90 = vmatprep.subr.mxu0 %v64
  %91 = vmatpush1.msra.mxu0 %v61
  %92 = vmatprep.subr.mxu0 0.0
  %93 = vmatpush1.msra.mxu0 0.0
  %94 = vmatprep.subr.mxu0 0.0
  %95 = vmatpush1.msra.mxu0 0.0
  %96 = vmatprep.subr.mxu0 0.0
  %97 = vmatpush1.msra.mxu0 0.0
  %98 = vmatprep.subr.mxu0 0.0
  %99 = vmatpush1.msra.mxu0 0.0
  %100 = vmatprep.subr.mxu0 0.0
  %101 = vmatpush1.msra.mxu0 0.0
  %102 = vmatprep.subr.mxu0 0.0
  %103 = vmatpush1.msra.mxu0 0.0
  %104 = vmatprep.subr.mxu0 0.0
  %105 = vmatpush1.msra.mxu0 0.0
  %106 = vmatprep.subr.mxu0 0.0
  %107 = vmatpush1.msra.mxu0 0.0
  %108 = vmatprep.subr.mxu0 0.0
  %109 = vmatpush1.msra.mxu0 0.0
  %110 = vmatprep.subr.mxu0 0.0
  %111 = vmatpush1.msra.mxu0 0.0
  %112 = vmatprep.subr.mxu0 0.0
  %113 = vmatpush1.msra.mxu0 0.0
  %114 = vmatprep.subr.mxu0 0.0
  %115 = vmatpush1.msra.mxu0 0.0
  %116 = vmatprep.subr.mxu0 0.0
  %117 = vmatpush1.msra.mxu0 0.0
  %118 = vmatprep.subr.mxu0 0.0
  %119 = vmatpush1.msra.mxu0 0.0
  %120 = vmatprep.subr.mxu0 0.0
  %121 = vmatpush1.msra.mxu0 0.0
  %122 = vmatprep.subr.mxu0 0.0
  %123 = vmatpush1.msra.mxu0 0.0
  %124 = vmatprep.subr.mxu0 0.0
  %125 = vmatpush1.msra.mxu0 0.0
  %126 = vmatprep.subr.mxu0 0.0
  %127 = vmatpush1.msra.mxu0 0.0
  %128 = vmatprep.subr.mxu0 0.0
  %129 = vmatpush1.msra.mxu0 0.0
  %130 = vmatprep.subr.mxu0 0.0
  %131 = vmatpush1.msra.mxu0 0.0
  %132 = vmatprep.subr.mxu0 0.0
  %133 = vmatpush1.msra.mxu0 0.0
  %134 = vmatprep.subr.mxu0 0.0
  %135 = vmatpush1.msra.mxu0 0.0
  %136 = vmatprep.subr.mxu0 0.0
  %137 = vmatpush1.msra.mxu0 0.0
  %138 = vmatprep.subr.mxu0 0.0
  %139 = vmatpush1.msra.mxu0 0.0
  %140 = vmatprep.subr.mxu0 0.0
  %141 = vmatpush1.msra.mxu0 0.0
  %142 = vmatprep.subr.mxu0 0.0
  %143 = vmatpush1.msra.mxu0 0.0
  %144 = vmatprep.subr.mxu0 0.0
  %145 = vmatpush1.msra.mxu0 0.0
  %146 = vmatprep.subr.mxu0 0.0
  %147 = vmatpush1.msra.mxu0 0.0
  %148 = vmatprep.mubr.f32.mxu0 0.0
  %149 = vmatmul.mubr.f32.gmra.mrb[0].mxu0 %v51
  %v150 = vpop.f32.mrb[0].mxu0
  %v151 = vadd.f32 0.0, %v150
  %v152 = vpop.f32.mrb[0].mxu0
  %v153 = vadd.f32 0.0, %v152
  %154 = vmatprep.mubr.f32.mxu0 0.0
  %155 = vmatmul.mubr.f32.gmra.mrb[0].mxu0 %v54
  %v156 = vpop.f32.mrb[0].mxu0
  %v157 = vadd.f32 0.0, %v156
  %v158 = vpop.f32.mrb[0].mxu0
  %v159 = vadd.f32 0.0, %v158
  %160 = vmatprep.mubr.f32.mxu0 0.0
  %161 = vmatmul.mubr.f32.gmra.mrb[0].mxu0 %v57
  %v162 = vpop.f32.mrb[0].mxu0
  %v163 = vadd.f32 0.0, %v162
  %v164 = vpop.f32.mrb[0].mxu0
  %v165 = vadd.f32 0.0, %v164
  %166 = vdwg.mxu0
  %167 = vmatprep.subr.mxu0 %v20
  %168 = vmatpush1.msra.mxu0 %v19
  %169 = vmatprep.subr.mxu0 %v28
  %170 = vmatpush1.msra.mxu0 %v27
  %171 = vmatprep.subr.mxu0 %v36
  %172 = vmatpush1.msra.mxu0 %v35
  %173 = vmatprep.subr.mxu0 %v70
  %174 = vmatpush1.msra.mxu0 %v67
  %175 = vmatprep.subr.mxu0 0.0
  %176 = vmatpush1.msra.mxu0 0.0
  %177 = vmatprep.subr.mxu0 0.0
  %178 = vmatpush1.msra.mxu0 0.0
  %179 = vmatprep.subr.mxu0 0.0
  %180 = vmatpush1.msra.mxu0 0.0
  %181 = vmatprep.subr.mxu0 0.0
  %182 = vmatpush1.msra.mxu0 0.0
  %183 = vmatprep.subr.mxu0 0.0
  %184 = vmatpush1.msra.mxu0 0.0
  %185 = vmatprep.subr.mxu0 0.0
  %186 = vmatpush1.msra.mxu0 0.0
  %187 = vmatprep.subr.mxu0 0.0
  %188 = vmatpush1.msra.mxu0 0.0
  %189 = vmatprep.subr.mxu0 0.0
  %190 = vmatpush1.msra.mxu0 0.0
  %191 = vmatprep.subr.mxu0 0.0
  %192 = vmatpush1.msra.mxu0 0.0
  %193 = vmatprep.subr.mxu0 0.0
  %194 = vmatpush1.msra.mxu0 0.0
  %195 = vmatprep.subr.mxu0 0.0
  %196 = vmatpush1.msra.mxu0 0.0
  %197 = vmatprep.subr.mxu0 0.0
  %198 = vmatpush1.msra.mxu0 0.0
  %199 = vmatprep.subr.mxu0 0.0
  %200 = vmatpush1.msra.mxu0 0.0
  %201 = vmatprep.subr.mxu0 0.0
  %202 = vmatpush1.msra.mxu0 0.0
  %203 = vmatprep.subr.mxu0 0.0
  %204 = vmatpush1.msra.mxu0 0.0
  %205 = vmatprep.subr.mxu0 0.0
  %206 = vmatpush1.msra.mxu0 0.0
  %207 = vmatprep.subr.mxu0 0.0
  %208 = vmatpush1.msra.mxu0 0.0
  %209 = vmatprep.subr.mxu0 0.0
  %210 = vmatpush1.msra.mxu0 0.0
  %211 = vmatprep.subr.mxu0 0.0
  %212 = vmatpush1.msra.mxu0 0.0
  %213 = vmatprep.subr.mxu0 0.0
  %214 = vmatpush1.msra.mxu0 0.0
  %215 = vmatprep.subr.mxu0 0.0
  %216 = vmatpush1.msra.mxu0 0.0
  %217 = vmatprep.subr.mxu0 0.0
  %218 = vmatpush1.msra.mxu0 0.0
  %219 = vmatprep.subr.mxu0 0.0
  %220 = vmatpush1.msra.mxu0 0.0
  %221 = vmatprep.subr.mxu0 0.0
  %222 = vmatpush1.msra.mxu0 0.0
  %223 = vmatprep.subr.mxu0 0.0
  %224 = vmatpush1.msra.mxu0 0.0
  %225 = vmatprep.subr.mxu0 0.0
  %226 = vmatpush1.msra.mxu0 0.0
  %227 = vmatprep.subr.mxu0 0.0
  %228 = vmatpush1.msra.mxu0 0.0
  %229 = vmatprep.subr.mxu0 0.0
  %230 = vmatpush1.msra.mxu0 0.0
  %231 = vmatprep.mubr.f32.mxu0 0.0
  %232 = vmatmul.mubr.f32.gmra.mrb[0].mxu0 %v51
  %v233 = vpop.f32.mrb[0].mxu0
  %v234 = vadd.f32 0.0, %v233
  %v235 = vpop.f32.mrb[0].mxu0
  %v236 = vadd.f32 0.0, %v235
  %237 = vmatprep.mubr.f32.mxu0 0.0
  %238 = vmatmul.mubr.f32.gmra.mrb[0].mxu0 %v54
  %v239 = vpop.f32.mrb[0].mxu0
  %v240 = vadd.f32 0.0, %v239
  %v241 = vpop.f32.mrb[0].mxu0
  %v242 = vadd.f32 0.0, %v241
  %243 = vmatprep.mubr.f32.mxu0 0.0
  %244 = vmatmul.mubr.f32.gmra.mrb[0].mxu0 %v57
  %v245 = vpop.f32.mrb[0].mxu0
  %v246 = vadd.f32 0.0, %v245
  %v247 = vpop.f32.mrb[0].mxu0
  %v248 = vadd.f32 0.0, %v247
  %249 = vdwg.mxu0
  %250 = vmatprep.subr.mxu0 %v22
  %251 = vmatpush1.msra.mxu0 %v21
  %252 = vmatprep.subr.mxu0 %v30
  %253 = vmatpush1.msra.mxu0 %v29
  %254 = vmatprep.subr.mxu0 %v38
  %255 = vmatpush1.msra.mxu0 %v37
  %256 = vmatprep.subr.mxu0 %v76
  %257 = vmatpush1.msra.mxu0 %v73
  %258 = vmatprep.subr.mxu0 0.0
  %259 = vmatpush1.msra.mxu0 0.0
  %260 = vmatprep.subr.mxu0 0.0
  %261 = vmatpush1.msra.mxu0 0.0
  %262 = vmatprep.subr.mxu0 0.0
  %263 = vmatpush1.msra.mxu0 0.0
  %264 = vmatprep.subr.mxu0 0.0
  %265 = vmatpush1.msra.mxu0 0.0
  %266 = vmatprep.subr.mxu0 0.0
  %267 = vmatpush1.msra.mxu0 0.0
  %268 = vmatprep.subr.mxu0 0.0
  %269 = vmatpush1.msra.mxu0 0.0
  %270 = vmatprep.subr.mxu0 0.0
  %271 = vmatpush1.msra.mxu0 0.0
  %272 = vmatprep.subr.mxu0 0.0
  %273 = vmatpush1.msra.mxu0 0.0
  %274 = vmatprep.subr.mxu0 0.0
  %275 = vmatpush1.msra.mxu0 0.0
  %276 = vmatprep.subr.mxu0 0.0
  %277 = vmatpush1.msra.mxu0 0.0
  %278 = vmatprep.subr.mxu0 0.0
  %279 = vmatpush1.msra.mxu0 0.0
  %280 = vmatprep.subr.mxu0 0.0
  %281 = vmatpush1.msra.mxu0 0.0
  %282 = vmatprep.subr.mxu0 0.0
  %283 = vmatpush1.msra.mxu0 0.0
  %284 = vmatprep.subr.mxu0 0.0
  %285 = vmatpush1.msra.mxu0 0.0
  %286 = vmatprep.subr.mxu0 0.0
  %287 = vmatpush1.msra.mxu0 0.0
  %288 = vmatprep.subr.mxu0 0.0
  %289 = vmatpush1.msra.mxu0 0.0
  %290 = vmatprep.subr.mxu0 0.0
  %291 = vmatpush1.msra.mxu0 0.0
  %292 = vmatprep.subr.mxu0 0.0
  %293 = vmatpush1.msra.mxu0 0.0
  %294 = vmatprep.subr.mxu0 0.0
  %295 = vmatpush1.msra.mxu0 0.0
  %296 = vmatprep.subr.mxu0 0.0
  %297 = vmatpush1.msra.mxu0 0.0
  %298 = vmatprep.subr.mxu0 0.0
  %299 = vmatpush1.msra.mxu0 0.0
  %300 = vmatprep.subr.mxu0 0.0
  %301 = vmatpush1.msra.mxu0 0.0
  %302 = vmatprep.subr.mxu0 0.0
  %303 = vmatpush1.msra.mxu0 0.0
  %304 = vmatprep.subr.mxu0 0.0
  %305 = vmatpush1.msra.mxu0 0.0
  %306 = vmatprep.subr.mxu0 0.0
  %307 = vmatpush1.msra.mxu0 0.0
  %308 = vmatprep.subr.mxu0 0.0
  %309 = vmatpush1.msra.mxu0 0.0
  %310 = vmatprep.subr.mxu0 0.0
  %311 = vmatpush1.msra.mxu0 0.0
  %312 = vmatprep.subr.mxu0 0.0
  %313 = vmatpush1.msra.mxu0 0.0
  %314 = vmatprep.mubr.f32.mxu0 0.0
  %315 = vmatmul.mubr.f32.gmra.mrb[0].mxu0 %v51
  %v316 = vpop.f32.mrb[0].mxu0
  %v317 = vadd.f32 0.0, %v316
  %v318 = vpop.f32.mrb[0].mxu0
  %v319 = vadd.f32 0.0, %v318
  %320 = vmatprep.mubr.f32.mxu0 0.0
  %321 = vmatmul.mubr.f32.gmra.mrb[0].mxu0 %v54
  %v322 = vpop.f32.mrb[0].mxu0
  %v323 = vadd.f32 0.0, %v322
  %v324 = vpop.f32.mrb[0].mxu0
  %v325 = vadd.f32 0.0, %v324
  %326 = vmatprep.mubr.f32.mxu0 0.0
  %327 = vmatmul.mubr.f32.gmra.mrb[0].mxu0 %v57
  %v328 = vpop.f32.mrb[0].mxu0
  %v329 = vadd.f32 0.0, %v328
  %v330 = vpop.f32.mrb[0].mxu0
  %v331 = vadd.f32 0.0, %v330
  %332 = vdwg.mxu0
  %333 = vmatprep.subr.mxu0 %v24
  %334 = vmatpush1.msra.mxu0 %v23
  %335 = vmatprep.subr.mxu0 %v32
  %336 = vmatpush1.msra.mxu0 %v31
  %337 = vmatprep.subr.mxu0 %v40
  %338 = vmatpush1.msra.mxu0 %v39
  %339 = vmatprep.subr.mxu0 %v82
  %340 = vmatpush1.msra.mxu0 %v79
  %341 = vmatprep.subr.mxu0 0.0
  %342 = vmatpush1.msra.mxu0 0.0
  %343 = vmatprep.subr.mxu0 0.0
  %344 = vmatpush1.msra.mxu0 0.0
  %345 = vmatprep.subr.mxu0 0.0
  %346 = vmatpush1.msra.mxu0 0.0
  %347 = vmatprep.subr.mxu0 0.0
  %348 = vmatpush1.msra.mxu0 0.0
  %349 = vmatprep.subr.mxu0 0.0
  %350 = vmatpush1.msra.mxu0 0.0
  %351 = vmatprep.subr.mxu0 0.0
  %352 = vmatpush1.msra.mxu0 0.0
  %353 = vmatprep.subr.mxu0 0.0
  %354 = vmatpush1.msra.mxu0 0.0
  %355 = vmatprep.subr.mxu0 0.0
  %356 = vmatpush1.msra.mxu0 0.0
  %357 = vmatprep.subr.mxu0 0.0
  %358 = vmatpush1.msra.mxu0 0.0
  %359 = vmatprep.subr.mxu0 0.0
  %360 = vmatpush1.msra.mxu0 0.0
  %361 = vmatprep.subr.mxu0 0.0
  %362 = vmatpush1.msra.mxu0 0.0
  %363 = vmatprep.subr.mxu0 0.0
  %364 = vmatpush1.msra.mxu0 0.0
  %365 = vmatprep.subr.mxu0 0.0
  %366 = vmatpush1.msra.mxu0 0.0
  %367 = vmatprep.subr.mxu0 0.0
  %368 = vmatpush1.msra.mxu0 0.0
  %369 = vmatprep.subr.mxu0 0.0
  %370 = vmatpush1.msra.mxu0 0.0
  %371 = vmatprep.subr.mxu0 0.0
  %372 = vmatpush1.msra.mxu0 0.0
  %373 = vmatprep.subr.mxu0 0.0
  %374 = vmatpush1.msra.mxu0 0.0
  %375 = vmatprep.subr.mxu0 0.0
  %376 = vmatpush1.msra.mxu0 0.0
  %377 = vmatprep.subr.mxu0 0.0
  %378 = vmatpush1.msra.mxu0 0.0
  %379 = vmatprep.subr.mxu0 0.0
  %380 = vmatpush1.msra.mxu0 0.0
  %381 = vmatprep.subr.mxu0 0.0
  %382 = vmatpush1.msra.mxu0 0.0
  %383 = vmatprep.subr.mxu0 0.0
  %384 = vmatpush1.msra.mxu0 0.0
  %385 = vmatprep.subr.mxu0 0.0
  %386 = vmatpush1.msra.mxu0 0.0
  %387 = vmatprep.subr.mxu0 0.0
  %388 = vmatpush1.msra.mxu0 0.0
  %389 = vmatprep.subr.mxu0 0.0
  %390 = vmatpush1.msra.mxu0 0.0
  %391 = vmatprep.subr.mxu0 0.0
  %392 = vmatpush1.msra.mxu0 0.0
  %393 = vmatprep.subr.mxu0 0.0
  %394 = vmatpush1.msra.mxu0 0.0
  %395 = vmatprep.subr.mxu0 0.0
  %396 = vmatpush1.msra.mxu0 0.0
  %397 = vmatprep.mubr.f32.mxu0 0.0
  %398 = vmatmul.mubr.f32.gmra.mrb[0].mxu0 %v51
  %v399 = vpop.f32.mrb[0].mxu0
  %v400 = vadd.f32 0.0, %v399
  %v401 = vpop.f32.mrb[0].mxu0
  %v402 = vadd.f32 0.0, %v401
  %403 = vmatprep.mubr.f32.mxu0 0.0
  %404 = vmatmul.mubr.f32.gmra.mrb[0].mxu0 %v54
  %v405 = vpop.f32.mrb[0].mxu0
  %v406 = vadd.f32 0.0, %v405
  %v407 = vpop.f32.mrb[0].mxu0
  %v408 = vadd.f32 0.0, %v407
  %409 = vmatprep.mubr.f32.mxu0 0.0
  %410 = vmatmul.mubr.f32.gmra.mrb[0].mxu0 %v57
  %v411 = vpop.f32.mrb[0].mxu0
  %v412 = vadd.f32 0.0, %v411
  %v413 = vpop.f32.mrb[0].mxu0
  %v414 = vadd.f32 0.0, %v413
  %415 = vdwg.mxu0
  %v416 = vmax.f32 %v151, 0.0
  %v417 = vmax.f32 %v153, 0.0
  %v418 = vmax.f32 %v234, 0.0
  %v419 = vmax.f32 %v236, 0.0
  %v420 = vmax.f32 %v317, 0.0
  %v421 = vmax.f32 %v319, 0.0
  %v422 = vmax.f32 %v400, 0.0
  %v423 = vmax.f32 %v402, 0.0
  %v424 = vmax.f32 %v157, 0.0
  %v425 = vmax.f32 %v159, 0.0
  %v426 = vmax.f32 %v240, 0.0
  %v427 = vmax.f32 %v242, 0.0
  %v428 = vmax.f32 %v323, 0.0
  %v429 = vmax.f32 %v325, 0.0
  %v430 = vmax.f32 %v406, 0.0
  %v431 = vmax.f32 %v408, 0.0
  %v432 = vmax.f32 %v163, 0.0
  %v433 = vmax.f32 %v165, 0.0
  %v434 = vmax.f32 %v246, 0.0
  %v435 = vmax.f32 %v248, 0.0
  %v436 = vmax.f32 %v329, 0.0
  %v437 = vmax.f32 %v331, 0.0
  %v438 = vmax.f32 %v412, 0.0
  %v439 = vmax.f32 %v414, 0.0
  %v440 = vld [vmem:[%s2] sm:$0x3]
  %vm441 = vcmask 171008
  %v443 = vsel %vm441, %v440, 0
  %vm445 = vcmask 1044480
  %v447 = vsel %vm445, %v432, 0
  %v450 = vsel %vm445, %v433, 0
  %v453 = vsel %vm445, %v434, 0
  %v456 = vsel %vm445, %v435, 0
  %v459 = vsel %vm445, %v436, 0
  %v462 = vsel %vm445, %v437, 0
  %v465 = vsel %vm445, %v438, 0
  %v468 = vsel %vm445, %v439, 0
  %470 = vmatprep.subr.mxu0 %v417
  %471 = vmatpush1.msra.mxu0 %v416
  %472 = vmatprep.subr.mxu0 %v425
  %473 = vmatpush1.msra.mxu0 %v424
  %474 = vmatprep.subr.mxu0 %v450
  %475 = vmatpush1.msra.mxu0 %v447
  %476 = vmatprep.subr.mxu0 0.0
  %477 = vmatpush1.msra.mxu0 0.0
  %478 = vmatprep.subr.mxu0 0.0
  %479 = vmatpush1.msra.mxu0 0.0
  %480 = vmatprep.subr.mxu0 0.0
  %481 = vmatpush1.msra.mxu0 0.0
  %482 = vmatprep.subr.mxu0 0.0
  %483 = vmatpush1.msra.mxu0 0.0
  %484 = vmatprep.subr.mxu0 0.0
  %485 = vmatpush1.msra.mxu0 0.0
  %486 = vmatprep.subr.mxu0 0.0
  %487 = vmatpush1.msra.mxu0 0.0
  %488 = vmatprep.subr.mxu0 0.0
  %489 = vmatpush1.msra.mxu0 0.0
  %490 = vmatprep.subr.mxu0 0.0
  %491 = vmatpush1.msra.mxu0 0.0
  %492 = vmatprep.subr.mxu0 0.0
  %493 = vmatpush1.msra.mxu0 0.0
  %494 = vmatprep.subr.mxu0 0.0
  %495 = vmatpush1.msra.mxu0 0.0
  %496 = vmatprep.subr.mxu0 0.0
  %497 = vmatpush1.msra.mxu0 0.0
  %498 = vmatprep.subr.mxu0 0.0
  %499 = vmatpush1.msra.mxu0 0.0
  %500 = vmatprep.subr.mxu0 0.0
  %501 = vmatpush1.msra.mxu0 0.0
  %502 = vmatprep.subr.mxu0 0.0
  %503 = vmatpush1.msra.mxu0 0.0
  %504 = vmatprep.subr.mxu0 0.0
  %505 = vmatpush1.msra.mxu0 0.0
  %506 = vmatprep.subr.mxu0 0.0
  %507 = vmatpush1.msra.mxu0 0.0
  %508 = vmatprep.subr.mxu0 0.0
  %509 = vmatpush1.msra.mxu0 0.0
  %510 = vmatprep.subr.mxu0 0.0
  %511 = vmatpush1.msra.mxu0 0.0
  %512 = vmatprep.subr.mxu0 0.0
  %513 = vmatpush1.msra.mxu0 0.0
  %514 = vmatprep.subr.mxu0 0.0
  %515 = vmatpush1.msra.mxu0 0.0
  %516 = vmatprep.subr.mxu0 0.0
  %517 = vmatpush1.msra.mxu0 0.0
  %518 = vmatprep.subr.mxu0 0.0
  %519 = vmatpush1.msra.mxu0 0.0
  %520 = vmatprep.subr.mxu0 0.0
  %521 = vmatpush1.msra.mxu0 0.0
  %522 = vmatprep.subr.mxu0 0.0
  %523 = vmatpush1.msra.mxu0 0.0
  %524 = vmatprep.subr.mxu0 0.0
  %525 = vmatpush1.msra.mxu0 0.0
  %526 = vmatprep.subr.mxu0 0.0
  %527 = vmatpush1.msra.mxu0 0.0
  %528 = vmatprep.subr.mxu0 0.0
  %529 = vmatpush1.msra.mxu0 0.0
  %530 = vmatprep.subr.mxu0 0.0
  %531 = vmatpush1.msra.mxu0 0.0
  %532 = vmatprep.subr.mxu0 0.0
  %533 = vmatpush1.msra.mxu0 0.0
  %534 = vmatprep.mubr.f32.mxu0 0.0
  %535 = vmatmul.mubr.f32.gmra.mrb[0].mxu0 %v443
  %v536 = vpop.f32.mrb[0].mxu0
  %v537 = vadd.f32 0.0, %v536
  %v538 = vpop.f32.mrb[0].mxu0
  %v539 = vadd.f32 0.0, %v538
  %540 = vdwg.mxu0
  %541 = vmatprep.subr.mxu0 %v419
  %542 = vmatpush1.msra.mxu0 %v418
  %543 = vmatprep.subr.mxu0 %v427
  %544 = vmatpush1.msra.mxu0 %v426
  %545 = vmatprep.subr.mxu0 %v456
  %546 = vmatpush1.msra.mxu0 %v453
  %547 = vmatprep.subr.mxu0 0.0
  %548 = vmatpush1.msra.mxu0 0.0
  %549 = vmatprep.subr.mxu0 0.0
  %550 = vmatpush1.msra.mxu0 0.0
  %551 = vmatprep.subr.mxu0 0.0
  %552 = vmatpush1.msra.mxu0 0.0
  %553 = vmatprep.subr.mxu0 0.0
  %554 = vmatpush1.msra.mxu0 0.0
  %555 = vmatprep.subr.mxu0 0.0
  %556 = vmatpush1.msra.mxu0 0.0
  %557 = vmatprep.subr.mxu0 0.0
  %558 = vmatpush1.msra.mxu0 0.0
  %559 = vmatprep.subr.mxu0 0.0
  %560 = vmatpush1.msra.mxu0 0.0
  %561 = vmatprep.subr.mxu0 0.0
  %562 = vmatpush1.msra.mxu0 0.0
  %563 = vmatprep.subr.mxu0 0.0
  %564 = vmatpush1.msra.mxu0 0.0
  %565 = vmatprep.subr.mxu0 0.0
  %566 = vmatpush1.msra.mxu0 0.0
  %567 = vmatprep.subr.mxu0 0.0
  %568 = vmatpush1.msra.mxu0 0.0
  %569 = vmatprep.subr.mxu0 0.0
  %570 = vmatpush1.msra.mxu0 0.0
  %571 = vmatprep.subr.mxu0 0.0
  %572 = vmatpush1.msra.mxu0 0.0
  %573 = vmatprep.subr.mxu0 0.0
  %574 = vmatpush1.msra.mxu0 0.0
  %575 = vmatprep.subr.mxu0 0.0
  %576 = vmatpush1.msra.mxu0 0.0
  %577 = vmatprep.subr.mxu0 0.0
  %578 = vmatpush1.msra.mxu0 0.0
  %579 = vmatprep.subr.mxu0 0.0
  %580 = vmatpush1.msra.mxu0 0.0
  %581 = vmatprep.subr.mxu0 0.0
  %582 = vmatpush1.msra.mxu0 0.0
  %583 = vmatprep.subr.mxu0 0.0
  %584 = vmatpush1.msra.mxu0 0.0
  %585 = vmatprep.subr.mxu0 0.0
  %586 = vmatpush1.msra.mxu0 0.0
  %587 = vmatprep.subr.mxu0 0.0
  %588 = vmatpush1.msra.mxu0 0.0
  %589 = vmatprep.subr.mxu0 0.0
  %590 = vmatpush1.msra.mxu0 0.0
  %591 = vmatprep.subr.mxu0 0.0
  %592 = vmatpush1.msra.mxu0 0.0
  %593 = vmatprep.subr.mxu0 0.0
  %594 = vmatpush1.msra.mxu0 0.0
  %595 = vmatprep.subr.mxu0 0.0
  %596 = vmatpush1.msra.mxu0 0.0
  %597 = vmatprep.subr.mxu0 0.0
  %598 = vmatpush1.msra.mxu0 0.0
  %599 = vmatprep.subr.mxu0 0.0
  %600 = vmatpush1.msra.mxu0 0.0
  %601 = vmatprep.subr.mxu0 0.0
  %602 = vmatpush1.msra.mxu0 0.0
  %603 = vmatprep.subr.mxu0 0.0
  %604 = vmatpush1.msra.mxu0 0.0
  %605 = vmatprep.mubr.f32.mxu0 0.0
  %606 = vmatmul.mubr.f32.gmra.mrb[0].mxu0 %v443
  %v607 = vpop.f32.mrb[0].mxu0
  %v608 = vadd.f32 0.0, %v607
  %v609 = vpop.f32.mrb[0].mxu0
  %v610 = vadd.f32 0.0, %v609
  %611 = vdwg.mxu0
  %612 = vmatprep.subr.mxu0 %v421
  %613 = vmatpush1.msra.mxu0 %v420
  %614 = vmatprep.subr.mxu0 %v429
  %615 = vmatpush1.msra.mxu0 %v428
  %616 = vmatprep.subr.mxu0 %v462
  %617 = vmatpush1.msra.mxu0 %v459
  %618 = vmatprep.subr.mxu0 0.0
  %619 = vmatpush1.msra.mxu0 0.0
  %620 = vmatprep.subr.mxu0 0.0
  %621 = vmatpush1.msra.mxu0 0.0
  %622 = vmatprep.subr.mxu0 0.0
  %623 = vmatpush1.msra.mxu0 0.0
  %624 = vmatprep.subr.mxu0 0.0
  %625 = vmatpush1.msra.mxu0 0.0
  %626 = vmatprep.subr.mxu0 0.0
  %627 = vmatpush1.msra.mxu0 0.0
  %628 = vmatprep.subr.mxu0 0.0
  %629 = vmatpush1.msra.mxu0 0.0
  %630 = vmatprep.subr.mxu0 0.0
  %631 = vmatpush1.msra.mxu0 0.0
  %632 = vmatprep.subr.mxu0 0.0
  %633 = vmatpush1.msra.mxu0 0.0
  %634 = vmatprep.subr.mxu0 0.0
  %635 = vmatpush1.msra.mxu0 0.0
  %636 = vmatprep.subr.mxu0 0.0
  %637 = vmatpush1.msra.mxu0 0.0
  %638 = vmatprep.subr.mxu0 0.0
  %639 = vmatpush1.msra.mxu0 0.0
  %640 = vmatprep.subr.mxu0 0.0
  %641 = vmatpush1.msra.mxu0 0.0
  %642 = vmatprep.subr.mxu0 0.0
  %643 = vmatpush1.msra.mxu0 0.0
  %644 = vmatprep.subr.mxu0 0.0
  %645 = vmatpush1.msra.mxu0 0.0
  %646 = vmatprep.subr.mxu0 0.0
  %647 = vmatpush1.msra.mxu0 0.0
  %648 = vmatprep.subr.mxu0 0.0
  %649 = vmatpush1.msra.mxu0 0.0
  %650 = vmatprep.subr.mxu0 0.0
  %651 = vmatpush1.msra.mxu0 0.0
  %652 = vmatprep.subr.mxu0 0.0
  %653 = vmatpush1.msra.mxu0 0.0
  %654 = vmatprep.subr.mxu0 0.0
  %655 = vmatpush1.msra.mxu0 0.0
  %656 = vmatprep.subr.mxu0 0.0
  %657 = vmatpush1.msra.mxu0 0.0
  %658 = vmatprep.subr.mxu0 0.0
  %659 = vmatpush1.msra.mxu0 0.0
  %660 = vmatprep.subr.mxu0 0.0
  %661 = vmatpush1.msra.mxu0 0.0
  %662 = vmatprep.subr.mxu0 0.0
  %663 = vmatpush1.msra.mxu0 0.0
  %664 = vmatprep.subr.mxu0 0.0
  %665 = vmatpush1.msra.mxu0 0.0
  %666 = vmatprep.subr.mxu0 0.0
  %667 = vmatpush1.msra.mxu0 0.0
  %668 = vmatprep.subr.mxu0 0.0
  %669 = vmatpush1.msra.mxu0 0.0
  %670 = vmatprep.subr.mxu0 0.0
  %671 = vmatpush1.msra.mxu0 0.0
  %672 = vmatprep.subr.mxu0 0.0
  %673 = vmatpush1.msra.mxu0 0.0
  %674 = vmatprep.subr.mxu0 0.0
  %675 = vmatpush1.msra.mxu0 0.0
  %676 = vmatprep.mubr.f32.mxu0 0.0
  %677 = vmatmul.mubr.f32.gmra.mrb[0].mxu0 %v443
  %v678 = vpop.f32.mrb[0].mxu0
  %v679 = vadd.f32 0.0, %v678
  %v680 = vpop.f32.mrb[0].mxu0
  %v681 = vadd.f32 0.0, %v680
  %682 = vdwg.mxu0
  %683 = vmatprep.subr.mxu0 %v423
  %684 = vmatpush1.msra.mxu0 %v422
  %685 = vmatprep.subr.mxu0 %v431
  %686 = vmatpush1.msra.mxu0 %v430
  %687 = vmatprep.subr.mxu0 %v468
  %688 = vmatpush1.msra.mxu0 %v465
  %689 = vmatprep.subr.mxu0 0.0
  %690 = vmatpush1.msra.mxu0 0.0
  %691 = vmatprep.subr.mxu0 0.0
  %692 = vmatpush1.msra.mxu0 0.0
  %693 = vmatprep.subr.mxu0 0.0
  %694 = vmatpush1.msra.mxu0 0.0
  %695 = vmatprep.subr.mxu0 0.0
  %696 = vmatpush1.msra.mxu0 0.0
  %697 = vmatprep.subr.mxu0 0.0
  %698 = vmatpush1.msra.mxu0 0.0
  %699 = vmatprep.subr.mxu0 0.0
  %700 = vmatpush1.msra.mxu0 0.0
  %701 = vmatprep.subr.mxu0 0.0
  %702 = vmatpush1.msra.mxu0 0.0
  %703 = vmatprep.subr.mxu0 0.0
  %704 = vmatpush1.msra.mxu0 0.0
  %705 = vmatprep.subr.mxu0 0.0
  %706 = vmatpush1.msra.mxu0 0.0
  %707 = vmatprep.subr.mxu0 0.0
  %708 = vmatpush1.msra.mxu0 0.0
  %709 = vmatprep.subr.mxu0 0.0
  %710 = vmatpush1.msra.mxu0 0.0
  %711 = vmatprep.subr.mxu0 0.0
  %712 = vmatpush1.msra.mxu0 0.0
  %713 = vmatprep.subr.mxu0 0.0
  %714 = vmatpush1.msra.mxu0 0.0
  %715 = vmatprep.subr.mxu0 0.0
  %716 = vmatpush1.msra.mxu0 0.0
  %717 = vmatprep.subr.mxu0 0.0
  %718 = vmatpush1.msra.mxu0 0.0
  %719 = vmatprep.subr.mxu0 0.0
  %720 = vmatpush1.msra.mxu0 0.0
  %721 = vmatprep.subr.mxu0 0.0
  %722 = vmatpush1.msra.mxu0 0.0
  %723 = vmatprep.subr.mxu0 0.0
  %724 = vmatpush1.msra.mxu0 0.0
  %725 = vmatprep.subr.mxu0 0.0
  %726 = vmatpush1.msra.mxu0 0.0
  %727 = vmatprep.subr.mxu0 0.0
  %728 = vmatpush1.msra.mxu0 0.0
  %729 = vmatprep.subr.mxu0 0.0
  %730 = vmatpush1.msra.mxu0 0.0
  %731 = vmatprep.subr.mxu0 0.0
  %732 = vmatpush1.msra.mxu0 0.0
  %733 = vmatprep.subr.mxu0 0.0
  %734 = vmatpush1.msra.mxu0 0.0
  %735 = vmatprep.subr.mxu0 0.0
  %736 = vmatpush1.msra.mxu0 0.0
  %737 = vmatprep.subr.mxu0 0.0
  %738 = vmatpush1.msra.mxu0 0.0
  %739 = vmatprep.subr.mxu0 0.0
  %740 = vmatpush1.msra.mxu0 0.0
  %741 = vmatprep.subr.mxu0 0.0
  %742 = vmatpush1.msra.mxu0 0.0
  %743 = vmatprep.subr.mxu0 0.0
  %744 = vmatpush1.msra.mxu0 0.0
  %745 = vmatprep.subr.mxu0 0.0
  %746 = vmatpush1.msra.mxu0 0.0
  %747 = vmatprep.mubr.f32.mxu0 0.0
  %748 = vmatmul.mubr.f32.gmra.mrb[0].mxu0 %v443
  %v749 = vpop.f32.mrb[0].mxu0
  %v750 = vadd.f32 0.0, %v749
  %v751 = vpop.f32.mrb[0].mxu0
  %v752 = vadd.f32 0.0, %v751
  %753 = vdwg.mxu0
  %v762 = vcombine.low %v537, %v539
  %v763 = vcombine.low %v608, %v610
  %v765 = vunpack.c.l.s4 1983009808
  %v766 = vunpack.c.0.s8 %v765
  %v767 = vlaneseq
  %v768 = vshrl.u32 %v767, 7
  %v769 = vsub.s32 %v766, %v768
  %v770 = vrot.slane %v762, %v769
  %v772 = vunpack.c.l.s4 1983009808
  %v773 = vunpack.c.0.s8 %v772
  %v774 = vlaneseq
  %v775 = vshrl.u32 %v774, 7
  %v776 = vsub.s32 %v773, %v775
  %v777 = vrot.slane %v763, %v776
  %v778 = vcombine.low %v770, %v777
  %v779 = vcombine.low %v679, %v681
  %v780 = vcombine.low %v750, %v752
  %v782 = vunpack.c.l.s4 1983009808
  %v783 = vunpack.c.0.s8 %v782
  %v784 = vlaneseq
  %v785 = vshrl.u32 %v784, 7
  %v786 = vsub.s32 %v783, %v785
  %v787 = vrot.slane %v779, %v786
  %v789 = vunpack.c.l.s4 1983009808
  %v790 = vunpack.c.0.s8 %v789
  %v791 = vlaneseq
  %v792 = vshrl.u32 %v791, 7
  %v793 = vsub.s32 %v790, %v792
  %v794 = vrot.slane %v780, %v793
  %v795 = vcombine.low %v787, %v794
  %798 = vst [vmem:[%s3] sm:$0xff] %v778
  %799 = vst [vmem:[%s3 + $0x8] sm:$0xff] %v795
  // Predicated region
  $region14: #{mine_forward.1} parent=0 // pred_check
    _
  $region15: #{mine_forward.1} parent=0 // pred_check_branch
    %801 = sbr.rel (0) target = $region17
  $region16: #{mine_forward.1} parent=0 // pred_region
    _
  $region17: #{mine_forward.1} parent=0 // pred_fallthru
    _
  // Predicated region
  $region18: #{mine_forward.1} parent=0 // pred_check
    _
  $region19: #{mine_forward.1} parent=0 // pred_check_branch
    %803 = sbr.rel (0) target = $region21
  $region20: #{mine_forward.1} parent=0 // pred_region
    _
  $region21: #{mine_forward.1} parent=0 // pred_fallthru
    _

</llo_original>
